<compile_context>
chip_gen: v6e
topology: v6e:2x2x1
jax: 0.10.0
libtpu: 0.0.40
codegen_flags: <defaults>
</compile_context>

<pallas_src>
import jax
import jax.numpy as jnp
from jax.experimental import pallas as pl
from jax.experimental.pallas import tpu as pltpu


def _weighted_rowsum_kernel(w_smem, x_ref, o_ref):
    # w_smem: (K,) f32 weights in SMEM (scalar reads -> sreg splats)
    # x_ref:  (K, TB) input tile in VMEM, batch on the lane axis
    # o_ref:  (1, TB) lane-dense output tile
    k_feat = x_ref.shape[0]
    acc = w_smem[0] * x_ref[pl.ds(0, 1), :].astype(jnp.float32)      # (1, TB)
    for k in range(1, k_feat):                                        # K=5: fully unrolled
        acc = acc + w_smem[k] * x_ref[pl.ds(k, 1), :].astype(jnp.float32)
    o_ref[...] = acc.astype(o_ref.dtype)


def _pick_lane_tile(b, max_tile):
    """Lane tile: 128-aligned, capped so the grid has >=2 steps when possible
    (keeps both v7x TensorCores busy under dimension_semantics=('parallel',))."""
    half = pl.cdiv(b, 2)
    tb = max(128, pl.cdiv(half, 128) * 128)
    return min(max_tile, tb)


def cdrp_fusion_forward_feature_major(x_t, w, *, max_tile=131072):
    """y = w @ x_t with x_t: (K, B) feature-major, w: (1, K). Returns (1, B)."""
    K, B = x_t.shape
    assert w.shape == (1, K)

    tb = _pick_lane_tile(B, max_tile)
    grid = pl.cdiv(B, tb)                     # ragged last block, no padding pass

    w_vec = w.reshape(K).astype(jnp.float32)  # 5 scalars -> SMEM

    # Real VMEM footprint: input (5->8 sublanes) f32 x2 bufs + output (1->8
    # sublanes) f32 x2 bufs  ~= 128 B per lane, plus a little headroom.
    vmem_limit = int(tb) * 128 + (2 << 20)

    itemsize = jnp.dtype(x_t.dtype).itemsize
    cost = pl.CostEstimate(
        flops=2 * B * K,
        transcendentals=0,
        bytes_accessed=B * K * itemsize + B * itemsize + K * 4,
    )

    return pl.pallas_call(
        _weighted_rowsum_kernel,
        out_shape=jax.ShapeDtypeStruct((1, B), x_t.dtype),
        grid=(grid,),
        in_specs=[
            pl.BlockSpec(memory_space=pltpu.MemorySpace.SMEM),   # weights: SMEM scalars
            pl.BlockSpec((K, tb), lambda i: (0, i)),             # x tile: streamed / double-buffered
        ],
        out_specs=pl.BlockSpec((1, tb), lambda i: (0, i)),       # lane-dense output slab
        compiler_params=pltpu.CompilerParams(
            dimension_semantics=("parallel",),   # batch axis splits across TCs (v7x megacore)
            vmem_limit_bytes=vmem_limit,
        ),
        cost_estimate=cost,
    )(w_vec, x_t)


def cdrp_fusion_forward(x, w, *, max_tile=131072):
    """y = x @ w.T with x: (B, K), w: (1, K) (nn.Linear weight) -> (B, 1)."""
    B, K = x.shape
    assert w.shape[1] == K and w.shape[0] == 1
    # TODO(synk): this transpose is one extra HBM pass over x; fuse it upstream
    # (keep activations feature-major) and call cdrp_fusion_forward_feature_major
    # directly to hit single-read HBM roofline.
    x_t = x.T                                  # (K, B): batch -> lanes
    y_t = cdrp_fusion_forward_feature_major(x_t, w, max_tile=max_tile)
    return y_t[0, :].reshape(B, 1)


if __name__ == "__main__":
    # Deterministic parameters matching the module:
    # nn.Linear(5, 1, bias=False), init.constant_(weight, 1.0) -> weight (1, 5).
    w = jnp.ones((1, 5), dtype=jnp.float32)

    # Example input: batch=8, in_features=5.
    key = jax.random.PRNGKey(0)
    x = jax.random.normal(key, (8, 5), dtype=jnp.float32)

    y = cdrp_fusion_forward(x, w)
    y = jax.block_until_ready(y)

    # Reference semantics: all-ones weight == row sum.
    y_ref = jnp.sum(x, axis=-1, keepdims=True)
    assert y.shape == (8, 1)
    assert jnp.allclose(y, y_ref, atol=1e-5), "mismatch vs reference"

    print("KERNEL_OK")
</pallas_src>

<mosaic_0001>
module attributes {stable_mosaic.version = 11 : i64} {
  func.func @_weighted_rowsum_kernel(%arg0: i32, %arg1: memref<5xf32, #tpu.memory_space<smem>>, %arg2: memref<5x128xf32, #tpu.memory_space<vmem>>, %arg3: memref<1x128xf32, #tpu.memory_space<vmem>>) attributes {dimension_semantics = [#tpu.dimension_semantics<parallel>], iteration_bounds = array<i64: 1>, scalar_prefetch = 0 : i64, scratch_operands = 0 : i64, tpu.core_type = #tpu.core_type<tc>, window_params = [{transform_indices = @transform_0, window_bounds = array<i64: 5>}, {transform_indices = @transform_1, window_bounds = array<i64: 5, 128>}, {transform_indices = @transform_2, window_bounds = array<i64: 1, 128>}]} {
    %c0 = arith.constant 0 : index
    %0 = memref.load %arg1[%c0] : memref<5xf32, #tpu.memory_space<smem>>
    %c0_0 = arith.constant 0 : index
    %c0_1 = arith.constant 0 : index
    %1 = vector.load %arg2[%c0_0, %c0_1] : memref<5x128xf32, #tpu.memory_space<vmem>>, vector<1x128xf32>
    %2 = vector.broadcast %0 : f32 to vector<1x128xf32>
    %3 = arith.mulf %2, %1 : vector<1x128xf32>
    %c1 = arith.constant 1 : index
    %4 = memref.load %arg1[%c1] : memref<5xf32, #tpu.memory_space<smem>>
    %c1_2 = arith.constant 1 : index
    %c0_3 = arith.constant 0 : index
    %5 = vector.load %arg2[%c1_2, %c0_3] : memref<5x128xf32, #tpu.memory_space<vmem>>, vector<1x128xf32>
    %6 = vector.broadcast %4 : f32 to vector<1x128xf32>
    %7 = arith.mulf %6, %5 : vector<1x128xf32>
    %8 = arith.addf %3, %7 : vector<1x128xf32>
    %c2 = arith.constant 2 : index
    %9 = memref.load %arg1[%c2] : memref<5xf32, #tpu.memory_space<smem>>
    %c2_4 = arith.constant 2 : index
    %c0_5 = arith.constant 0 : index
    %10 = vector.load %arg2[%c2_4, %c0_5] : memref<5x128xf32, #tpu.memory_space<vmem>>, vector<1x128xf32>
    %11 = vector.broadcast %9 : f32 to vector<1x128xf32>
    %12 = arith.mulf %11, %10 : vector<1x128xf32>
    %13 = arith.addf %8, %12 : vector<1x128xf32>
    %c3 = arith.constant 3 : index
    %14 = memref.load %arg1[%c3] : memref<5xf32, #tpu.memory_space<smem>>
    %c3_6 = arith.constant 3 : index
    %c0_7 = arith.constant 0 : index
    %15 = vector.load %arg2[%c3_6, %c0_7] : memref<5x128xf32, #tpu.memory_space<vmem>>, vector<1x128xf32>
    %16 = vector.broadcast %14 : f32 to vector<1x128xf32>
    %17 = arith.mulf %16, %15 : vector<1x128xf32>
    %18 = arith.addf %13, %17 : vector<1x128xf32>
    %c4 = arith.constant 4 : index
    %19 = memref.load %arg1[%c4] : memref<5xf32, #tpu.memory_space<smem>>
    %c4_8 = arith.constant 4 : index
    %c0_9 = arith.constant 0 : index
    %20 = vector.load %arg2[%c4_8, %c0_9] : memref<5x128xf32, #tpu.memory_space<vmem>>, vector<1x128xf32>
    %21 = vector.broadcast %19 : f32 to vector<1x128xf32>
    %22 = arith.mulf %21, %20 : vector<1x128xf32>
    %23 = arith.addf %18, %22 : vector<1x128xf32>
    %c0_10 = arith.constant 0 : index
    %c0_11 = arith.constant 0 : index
    %24 = vector.load %arg3[%c0_10, %c0_11] : memref<1x128xf32, #tpu.memory_space<vmem>>, vector<1x128xf32>
    tpu.vector_store %arg3[%c0_10, %c0_11], %23 {strides = array<i32>} : memref<1x128xf32, #tpu.memory_space<vmem>>, vector<1x128xf32>,
    return
  }
  func.func @transform_0(%arg0: i32) -> i32 {
    %c0_i32 = arith.constant 0 : i32
    %c0_i32_0 = arith.constant 0 : i32
    return %c0_i32 : i32
  }
  func.func @transform_1(%arg0: i32) -> (i32, i32) {
    %c0_i32 = arith.constant 0 : i32
    %c0_i32_0 = arith.constant 0 : i32
    return %c0_i32, %arg0 : i32, i32
  }
  func.func @transform_2(%arg0: i32) -> (i32, i32) {
    %c0_i32 = arith.constant 0 : i32
    %c0_i32_0 = arith.constant 0 : i32
    return %c0_i32, %arg0 : i32, i32
  }
}

</mosaic_0001>

<llo_original>
// kernel: tpu_custom_call.1
$region0: #{tpu_custom_call.1}
  #allocation0 [shape = 'u32[]', space=smem, size = 0x4, offset = 0x4, fixed_abs, tag = 'smem constant byte address 0x4 - core index']
  #allocation1 [shape = 'u32[144,128]{1,0:T(1,128)}', space=vmem, size = 0x12000, scoped, tag = 'internal scratch']
  %s0 = inlined_call_operand.hbm [shape: f32[5], index: 0, kind: input, shape index: {}]
  %s1 = inlined_call_operand.hbm [shape: f32[5,8], index: 1, kind: input, shape index: {}]
  %s2 = inlined_call_operand.hbm [shape: f32[1,8], index: 2, kind: output, shape index: {}]
  %s3 = sld [smem:[#allocation0]]
  $region26: #{tpu_custom_call.1} parent=0
    _
  %s5 = ssub.s32 1, %s3
  %s6 = scalar_select 0, %s5, %s3
  $region1: #{tpu_custom_call.1} parent=0
    #allocation2 [shape = 'u8[512]{0}', space=smem, size = 0x200, scoped, tag = 'input window, operand 0, single buffered']
    #allocation3 [shape = 's32[1]{0}', space=sflag, size = 0x4, scoped, tag = 'scoped memory for tpu_custom_call.1']
    #allocation4 [shape = 's32[1]{0}', space=sflag, size = 0x4, scoped, tag = 'scoped memory for tpu_custom_call.1']
    #allocation5 [shape = 's32[1]{0}', space=sflag, size = 0x4, scoped, tag = 'scoped memory for tpu_custom_call.1']
    #allocation6 [shape = 'u8[4096]{0}', space=vmem, size = 0x1000, scoped, tag = 'input window, operand 1, single buffered']
    #allocation7 [shape = 'u8[512]{0}', space=vmem, size = 0x400, scoped, tag = 'output window, operand 0, single buffered']
    %7 = vsyncpa [#allocation5], 0
    %8 = vsyncpa [#allocation3], 0
    %9 = vsyncpa [#allocation4], 0
    // Predicated region
    $region2: #{tpu_custom_call.1} parent=1 // pred_check
      _
    $region3: #{tpu_custom_call.1} parent=1 // pred_check_branch
      %11 = sbr.rel (0) target = $region5
    $region4: #{tpu_custom_call.1} parent=1 // pred_region
      %s13 = ssub.s32 16, 16
      %14 = vsyncadd [#allocation5], %s13
      %17 = dma.hbm_to_smem %s0, 16, [#allocation2], [#allocation5]
    $region5: #{tpu_custom_call.1} parent=1 // pred_fallthru
      _
    // Predicated region
    $region6: #{tpu_custom_call.1} parent=1 // pred_check
      _
    $region7: #{tpu_custom_call.1} parent=1 // pred_check_branch
      %19 = sbr.rel (0) target = $region9
    $region8: #{tpu_custom_call.1} parent=1 // pred_region
      %s21 = ssub.s32 128, 128
      %22 = vsyncadd [#allocation3], %s21
      %s24 = sshll.u32 [#allocation6], 4
      %s25 = int_to_ptr.vmem [resolvable:$true] %s24
      %27 = dma.hbm_to_vmem [thread:$0]  %s1, 128, %s25, [#allocation3]
    $region9: #{tpu_custom_call.1} parent=1 // pred_fallthru
      _
    // Predicated region
    $region10: #{tpu_custom_call.1} parent=1 // pred_check
      _
    $region11: #{tpu_custom_call.1} parent=1 // pred_check_branch
      %29 = sbr.rel (0) target = $region13
    $region12: #{tpu_custom_call.1} parent=1 // pred_region
      %30 = dma.done [#allocation5], 16
    $region13: #{tpu_custom_call.1} parent=1 // pred_fallthru
      _
    // Predicated region
    $region14: #{tpu_custom_call.1} parent=1 // pred_check
      _
    $region15: #{tpu_custom_call.1} parent=1 // pred_check_branch
      %32 = sbr.rel (0) target = $region17
    $region16: #{tpu_custom_call.1} parent=1 // pred_region
      %33 = dma.done [#allocation3], 128
    $region17: #{tpu_custom_call.1} parent=1 // pred_fallthru
      _
    %34 = sfence
    %s35 = sld [smem:[#allocation2]]
    %v36 = vld [vmem:[#allocation6] sm:$0x1]
    %v37 = vstv %s35
    %v38 = vmul.f32 %v37, %v36
    %s39 = sld [smem:[#allocation2 + $0x1]]
    %v40 = vld [vmem:[#allocation6 + $0x1] sm:$0x1]
    %v41 = vstv %s39
    %v42 = vmul.f32 %v41, %v40
    %v43 = vadd.f32 %v38, %v42
    %s44 = sld [smem:[#allocation2 + $0x2]]
    %v45 = vld [vmem:[#allocation6 + $0x2] sm:$0x1]
    %v46 = vstv %s44
    %v47 = vmul.f32 %v46, %v45
    %v48 = vadd.f32 %v43, %v47
    %s49 = sld [smem:[#allocation2 + $0x3]]
    %v50 = vld [vmem:[#allocation6 + $0x3] sm:$0x1]
    %v51 = vstv %s49
    %v52 = vmul.f32 %v51, %v50
    %v53 = vadd.f32 %v48, %v52
    %s54 = sld [smem:[#allocation2 + $0x4]]
    %v55 = vld [vmem:[#allocation6 + $0x4] sm:$0x1]
    %v56 = vstv %s54
    %v57 = vmul.f32 %v56, %v55
    %v58 = vadd.f32 %v53, %v57
    %59 = vst [vmem:[#allocation7] sm:$0x1] %v58
    // Predicated region
    $region18: #{tpu_custom_call.1} parent=1 // pred_check
      _
    $region19: #{tpu_custom_call.1} parent=1 // pred_check_branch
      %61 = sbr.rel (0) target = $region21
    $region20: #{tpu_custom_call.1} parent=1 // pred_region
      %s63 = ssub.s32 16, 16
      %64 = vsyncadd [#allocation4], %s63
      %s66 = sshll.u32 [#allocation7], 4
      %s67 = int_to_ptr.vmem [resolvable:$true] %s66
      %69 = dma.vmem_to_hbm [thread:$0]  %s67, 16, %s2, [#allocation4]
    $region21: #{tpu_custom_call.1} parent=1 // pred_fallthru
      _
    // Predicated region
    $region22: #{tpu_custom_call.1} parent=1 // pred_check
      _
    $region23: #{tpu_custom_call.1} parent=1 // pred_check_branch
      %71 = sbr.rel (0) target = $region25
    $region24: #{tpu_custom_call.1} parent=1 // pred_region
      %72 = dma.done [#allocation4], 16
    $region25: #{tpu_custom_call.1} parent=1 // pred_fallthru
      _
    %73 = vsyncpa [#allocation3], 1
    %74 = vsyncpa [#allocation4], 1
    %75 = vsyncpa [#allocation5], 1

</llo_original>
